<compile_context>
chip_gen: v5e
topology: v5e:2x2
jax: 0.10.0
libtpu: 0.0.40
codegen_flags: <defaults>
</compile_context>

<pallas_src>
import jax
import jax.numpy as jnp
from jax.experimental import pallas as pl
from jax.experimental.pallas import tpu as pltpu


# ----------------------------------------------------------------------------
# Faithful port of Decoder.forward(): no inputs, no parameters, returns None.
# Deliberately NOT a Pallas kernel and NOT jitted — the path is semantically
# empty, so any wrapper would only add dispatch overhead.
# ----------------------------------------------------------------------------
def decoder_forward():
    """Exact semantic equivalent of Decoder().forward() in the reference code."""
    return None


# ----------------------------------------------------------------------------
# Standalone smoke-test kernel (gridded identity copy) — NOT the Decoder path.
# Exercises BlockSpec auto-pipelining with lane-dense (512, 512) f32 tiles.
# ----------------------------------------------------------------------------
def _copy_kernel(x_ref, o_ref):
    o_ref[...] = x_ref[...]


def _identity_smoke_test(x: jax.Array, *, tile: int = 512) -> jax.Array:
    m, n = x.shape
    assert m % tile == 0 and n % tile == 0, "smoke test expects tile-divisible shape"
    grid = (m // tile, n // tile)
    return pl.pallas_call(
        _copy_kernel,
        out_shape=jax.ShapeDtypeStruct(x.shape, x.dtype),
        grid_spec=pltpu.PrefetchScalarGridSpec(
            num_scalar_prefetch=0,
            grid=grid,
            in_specs=[pl.BlockSpec((tile, tile), lambda i, j: (i, j))],
            out_specs=pl.BlockSpec((tile, tile), lambda i, j: (i, j)),
        ),
        compiler_params=pltpu.CompilerParams(
            # Both axes are independent copies -> shard across TCs on v7x.
            dimension_semantics=("parallel", "parallel"),
        ),
    )(x)


if __name__ == "__main__":
    # 1) The actual Decoder forward: no inputs, returns None, no kernel launch.
    result = decoder_forward()
    assert result is None, "Decoder.forward() must return None"

    # 2) Standalone Pallas smoke test: gridded, pipelined HBM->VMEM->HBM copy.
    #    (Kept outside the Decoder path; the module itself has no compute.)
    key = jax.random.PRNGKey(0)
    x = jax.random.normal(key, (2048, 2048), dtype=jnp.float32)
    y = _identity_smoke_test(x)
    jax.block_until_ready(y)
    assert bool(jnp.array_equal(y, x)), "identity smoke-test kernel mismatch"

    print("KERNEL_OK")
</pallas_src>

<mosaic_0001>
module attributes {stable_mosaic.version = 11 : i64} {
  func.func @_copy_kernel(%arg0: i32, %arg1: i32, %arg2: memref<512x512xf32, #tpu.memory_space<vmem>>, %arg3: memref<512x512xf32, #tpu.memory_space<vmem>>) attributes {dimension_semantics = [#tpu.dimension_semantics<parallel>, #tpu.dimension_semantics<parallel>], iteration_bounds = array<i64: 4, 4>, scalar_prefetch = 0 : i64, scratch_operands = 0 : i64, tpu.core_type = #tpu.core_type<tc>, window_params = [{transform_indices = @transform_0, window_bounds = array<i64: 512, 512>}, {transform_indices = @transform_1, window_bounds = array<i64: 512, 512>}]} {
    %c0 = arith.constant 0 : index
    %c0_0 = arith.constant 0 : index
    %0 = vector.load %arg2[%c0, %c0_0] : memref<512x512xf32, #tpu.memory_space<vmem>>, vector<512x512xf32>
    %c0_1 = arith.constant 0 : index
    %c0_2 = arith.constant 0 : index
    %1 = vector.load %arg3[%c0_1, %c0_2] : memref<512x512xf32, #tpu.memory_space<vmem>>, vector<512x512xf32>
    tpu.vector_store %arg3[%c0_1, %c0_2], %0 {strides = array<i32>} : memref<512x512xf32, #tpu.memory_space<vmem>>, vector<512x512xf32>,
    return
  }
  func.func @transform_0(%arg0: i32, %arg1: i32) -> (i32, i32) {
    %c0_i32 = arith.constant 0 : i32
    return %arg0, %arg1 : i32, i32
  }
  func.func @transform_1(%arg0: i32, %arg1: i32) -> (i32, i32) {
    %c0_i32 = arith.constant 0 : i32
    return %arg0, %arg1 : i32, i32
  }
}

</mosaic_0001>

<llo_original>
// kernel: tpu_custom_call.1
$region0: #{tpu_custom_call.1}
  #allocation0 [shape = 'u32[]', space=smem, size = 0x4, offset = 0x4, fixed_abs, tag = 'smem constant byte address 0x4 - core index']
  #allocation1 [shape = 'u32[72,128]{1,0:T(1,128)}', space=vmem, size = 0x9000, scoped, tag = 'internal scratch']
  %s0 = inlined_call_operand.hbm [shape: f32[2048,2048], index: 0, kind: input, shape index: {}]
  %s1 = inlined_call_operand.hbm [shape: f32[2048,2048], index: 1, kind: output, shape index: {}]
  %s2 = sld [smem:[#allocation0]]
  $region41: #{tpu_custom_call.1} parent=0
    _
  %s4 = ssub.s32 1, %s2
  %s5 = scalar_select 0, %s4, %s2
  $region1: #{tpu_custom_call.1} parent=0
    #allocation2 [shape = 'u8[2097152]{0}', space=vmem, size = 0x200000, scoped, tag = 'input window, operand 0']
    #allocation3 [shape = 's32[2]{0}', space=sflag, size = 0x8, scoped, tag = 'scoped memory for tpu_custom_call.1']
    #allocation4 [shape = 's32[2]{0}', space=sflag, size = 0x8, scoped, tag = 'scoped memory for tpu_custom_call.1']
    #allocation5 [shape = 'u8[2097152]{0}', space=vmem, size = 0x200000, scoped, tag = 'output window, operand 0']
    %6 = vsyncpa [#allocation3], 0
    %s7 = scalar_lea.sflag [#allocation3], 1
    %8 = vsyncpa %s7, 0
    %9 = vsyncpa [#allocation4], 0
    %s10 = scalar_lea.sflag [#allocation4], 1
    %11 = vsyncpa %s10, 0
    loop: start=0, step=1, limit=18
    $region2: #{tpu_custom_call.1} parent=1 // loop_pre_header
      _
    $region3: #{tpu_custom_call.1} parent=1 // loop_header
      %s13 = sphi 0, %s17
      %p14 = scmp.ge.s32.totalorder %s13, 18
      %s20 = sphi 0, %s32
      %s21 = sphi 0, %s28
      %s22 = sphi 0, %s20
      %s23 = sphi 0, %s21
      %s24 = sphi 0, %s22
      %s25 = sphi 0, %s23
      %s37 = sphi 0, %s39
      %s40 = sphi 0, %s37
      %s41 = sphi 0, %s40
      %s57 = sphi 0, %s41
      %s65 = sphi 0, %s67
      %s68 = sphi 0, %s65
      %s69 = sphi 0, %s68
      %s85 = sphi 0, %s69
    $region4: #{tpu_custom_call.1} parent=1 // loop_header_branch
      %16 = sbr.rel (%p14) target = $region8
    $region5: #{tpu_custom_call.1} parent=1 // loop_body
      %s18 = ssub.s32 %s13, 1
      %s19 = ssub.s32 %s13, 2
      %s26 = sadd.s32 1, %s21
      %p27 = scmp.ge.s32.totalorder %s26, 4
      %s28 = scalar_select %p27, 0, %s26
      %s29 = sadd.s32 1, %s20
      %s30 = scalar_select %p27, %s29, %s20
      %p31 = scmp.ge.s32.totalorder %s30, 4
      %s32 = scalar_select %p31, 0, %s30
      %s33 = ssub.s32 %s20, %s32
      %s34 = ssub.s32 %s21, %s28
      %s35 = sor.u32 %s33, %s34
      %p36 = scmp.eq.s32.totalorder %s35, 0
      %s38 = sadd.s32 %s37, 1
      %s39 = scalar_select %p36, %s37, %s38
      %p42 = pneg %p36
      %p43 = scmp.eq.s32.totalorder %s13, 15
      %p44 = por %p42, %p43
      %p45 = scmp.ne.s32.totalorder %s37, %s40
      %p46 = scmp.eq.s32.totalorder %s13, 0
      %p47 = por %p45, %p46
      %p48 = scmp.ne.s32.totalorder %s37, %s40
      %p49 = scmp.eq.s32.totalorder %s18, 15
      %p50 = por %p48, %p49
      %p51 = scmp.ne.s32.totalorder %s40, %s41
      %p52 = scmp.eq.s32.totalorder %s18, 0
      %p53 = por %p51, %p52
      %p54 = scmp.ne.s32.totalorder %s40, %s41
      %p55 = scmp.eq.s32.totalorder %s19, 15
      %p56 = por %p54, %p55
      %p58 = scmp.ne.s32.totalorder %s41, %s57
      %p59 = scmp.eq.s32.totalorder %s19, 0
      %p60 = por %p58, %p59
      %s61 = ssub.s32 %s20, %s32
      %s62 = ssub.s32 %s21, %s28
      %s63 = sor.u32 %s61, %s62
      %p64 = scmp.eq.s32.totalorder %s63, 0
      %s66 = sadd.s32 %s65, 1
      %s67 = scalar_select %p64, %s65, %s66
      %p70 = pneg %p64
      %p71 = scmp.eq.s32.totalorder %s13, 15
      %p72 = por %p70, %p71
      %p73 = scmp.ne.s32.totalorder %s65, %s68
      %p74 = scmp.eq.s32.totalorder %s13, 0
      %p75 = por %p73, %p74
      %p76 = scmp.ne.s32.totalorder %s65, %s68
      %p77 = scmp.eq.s32.totalorder %s18, 15
      %p78 = por %p76, %p77
      %p79 = scmp.ne.s32.totalorder %s68, %s69
      %p80 = scmp.eq.s32.totalorder %s18, 0
      %p81 = por %p79, %p80
      %p82 = scmp.ne.s32.totalorder %s68, %s69
      %p83 = scmp.eq.s32.totalorder %s19, 15
      %p84 = por %p82, %p83
      %p86 = scmp.ne.s32.totalorder %s69, %s85
      %p87 = scmp.eq.s32.totalorder %s19, 0
      %p88 = por %p86, %p87
      %p89 = scmp.le.s32.totalorder 1, %s13
      %p90 = scmp.lt.s32.totalorder %s13, 17
      %p91 = pnand %p89, %p90
      %p92 = pneg %p91
      // Predicated region
      $region9: #{tpu_custom_call.1} parent=5 // pred_check
        _
      $region10: #{tpu_custom_call.1} parent=5 // pred_check_branch
        %94 = sbr.rel (%p91) target = $region12
      $region11: #{tpu_custom_call.1} parent=5 // pred_region
        %s95 = ssub.s32 %s13, 1
      $region12: #{tpu_custom_call.1} parent=5 // pred_fallthru
        _
      %p96 = scmp.lt.s32.totalorder %s13, 16
      // Predicated region
      $region13: #{tpu_custom_call.1} parent=5 // pred_check
        %p97 = pneg %p96
      $region14: #{tpu_custom_call.1} parent=5 // pred_check_branch
        %99 = sbr.rel (%p97) target = $region16
      $region15: #{tpu_custom_call.1} parent=5 // pred_region
        // Predicated region
        $region17: #{tpu_custom_call.1} parent=15 // pred_check
          %p100 = pneg %p47
        $region18: #{tpu_custom_call.1} parent=15 // pred_check_branch
          %102 = sbr.rel (%p100) target = $region20
        $region19: #{tpu_custom_call.1} parent=15 // pred_region
          %s103 = sand.u32 %s37, 1
          %s104 = scalar_lea.sflag [#allocation3], %s103
          %s105 = sand.u32 %s37, 1
          %s106 = smul.addr %s105, 2048
          %s107 = scalar_lea.vmem [#allocation2], %s106
          %s108 = smul.u32 64, %s20
          %s109 = smul.u32 4, %s21
          %111 = vsyncadd %s104, 0
          %s112 = smul.addr %s108, 16
          %s113 = sadd.s32 %s109, %s112
          %s114 = smul.addr %s113, 8
          %s115 = scalar_lea.hbm %s0, %s114
          %s116 = sshll.u32 %s115, 4
          %s117 = int_to_ptr.hbm [resolvable:$true] %s116
          %s118 = sshll.u32 %s107, 4
          %s119 = int_to_ptr.vmem [resolvable:$true] %s118
          %124 = dma.hbm_to_vmem [thread:$0]  %s117, 32768, %s119, %s104, 2048, 512, 32
        $region20: #{tpu_custom_call.1} parent=15 // pred_fallthru
          _
      $region16: #{tpu_custom_call.1} parent=5 // pred_fallthru
        _
      %p125 = scmp.le.s32.totalorder 1, %s13
      %p126 = scmp.lt.s32.totalorder %s13, 17
      %p127 = pnand %p125, %p126
      %p128 = pneg %p127
      // Predicated region
      $region21: #{tpu_custom_call.1} parent=5 // pred_check
        _
      $region22: #{tpu_custom_call.1} parent=5 // pred_check_branch
        %130 = sbr.rel (%p127) target = $region24
      $region23: #{tpu_custom_call.1} parent=5 // pred_region
        %s131 = ssub.s32 %s13, 1
        %s132 = sand.u32 %s40, 1
        %s133 = scalar_lea.sflag [#allocation3], %s132
        %s134 = sand.u32 %s40, 1
        %s135 = smul.addr %s134, 2048
        %s136 = scalar_lea.vmem [#allocation2], %s135
        // Predicated region
        $region25: #{tpu_custom_call.1} parent=23 // pred_check
          %p137 = pneg %p53
        $region26: #{tpu_custom_call.1} parent=23 // pred_check_branch
          %139 = sbr.rel (%p137) target = $region28
        $region27: #{tpu_custom_call.1} parent=23 // pred_region
          %141 = dma.done %s133, 32768
        $region28: #{tpu_custom_call.1} parent=23 // pred_fallthru
          _
        %s142 = sand.u32 %s40, 1
        %s143 = scalar_lea.sflag [#allocation3], %s142
        %s144 = sand.u32 %s40, 1
        %s145 = smul.addr %s144, 2048
        %s146 = scalar_lea.vmem [#allocation2], %s145
        %p147 = pneg %p53
        %p148 = pneg %p50
        %p149 = pneg %p81
        %p150 = pneg %p78
        %s151 = sand.u32 %s68, 1
        %s152 = scalar_lea.sflag [#allocation4], %s151
        %s153 = sand.u32 %s68, 1
        %s154 = smul.addr %s153, 2048
        %s155 = scalar_lea.vmem [#allocation5], %s154
        %s156 = smul.u32 64, %s22
        %s157 = smul.u32 4, %s23
        %s158 = smul.u32 64, %s22
        %s159 = smul.u32 4, %s23
        %v160 = vld [vmem:[%s136] sm:$0xff]
        %v161 = vld [vmem:[%s136 + $0x8] sm:$0xff]
        %v162 = vld [vmem:[%s136 + $0x10] sm:$0xff]
        %v163 = vld [vmem:[%s136 + $0x18] sm:$0xff]
        %v164 = vld [vmem:[%s136 + $0x20] sm:$0xff]
        %v165 = vld [vmem:[%s136 + $0x28] sm:$0xff]
        %v166 = vld [vmem:[%s136 + $0x30] sm:$0xff]
        %v167 = vld [vmem:[%s136 + $0x38] sm:$0xff]
        %v168 = vld [vmem:[%s136 + $0x40] sm:$0xff]
        %v169 = vld [vmem:[%s136 + $0x48] sm:$0xff]
        %v170 = vld [vmem:[%s136 + $0x50] sm:$0xff]
        %v171 = vld [vmem:[%s136 + $0x58] sm:$0xff]
        %v172 = vld [vmem:[%s136 + $0x60] sm:$0xff]
        %v173 = vld [vmem:[%s136 + $0x68] sm:$0xff]
        %v174 = vld [vmem:[%s136 + $0x70] sm:$0xff]
        %v175 = vld [vmem:[%s136 + $0x78] sm:$0xff]
        %v176 = vld [vmem:[%s136 + $0x80] sm:$0xff]
        %v177 = vld [vmem:[%s136 + $0x88] sm:$0xff]
        %v178 = vld [vmem:[%s136 + $0x90] sm:$0xff]
        %v179 = vld [vmem:[%s136 + $0x98] sm:$0xff]
        %v180 = vld [vmem:[%s136 + $0xa0] sm:$0xff]
        %v181 = vld [vmem:[%s136 + $0xa8] sm:$0xff]
        %v182 = vld [vmem:[%s136 + $0xb0] sm:$0xff]
        %v183 = vld [vmem:[%s136 + $0xb8] sm:$0xff]
        %v184 = vld [vmem:[%s136 + $0xc0] sm:$0xff]
        %v185 = vld [vmem:[%s136 + $0xc8] sm:$0xff]
        %v186 = vld [vmem:[%s136 + $0xd0] sm:$0xff]
        %v187 = vld [vmem:[%s136 + $0xd8] sm:$0xff]
        %v188 = vld [vmem:[%s136 + $0xe0] sm:$0xff]
        %v189 = vld [vmem:[%s136 + $0xe8] sm:$0xff]
        %v190 = vld [vmem:[%s136 + $0xf0] sm:$0xff]
        %v191 = vld [vmem:[%s136 + $0xf8] sm:$0xff]
        %v192 = vld [vmem:[%s136 + $0x100] sm:$0xff]
        %v193 = vld [vmem:[%s136 + $0x108] sm:$0xff]
        %v194 = vld [vmem:[%s136 + $0x110] sm:$0xff]
        %v195 = vld [vmem:[%s136 + $0x118] sm:$0xff]
        %v196 = vld [vmem:[%s136 + $0x120] sm:$0xff]
        %v197 = vld [vmem:[%s136 + $0x128] sm:$0xff]
        %v198 = vld [vmem:[%s136 + $0x130] sm:$0xff]
        %v199 = vld [vmem:[%s136 + $0x138] sm:$0xff]
        %v200 = vld [vmem:[%s136 + $0x140] sm:$0xff]
        %v201 = vld [vmem:[%s136 + $0x148] sm:$0xff]
        %v202 = vld [vmem:[%s136 + $0x150] sm:$0xff]
        %v203 = vld [vmem:[%s136 + $0x158] sm:$0xff]
        %v204 = vld [vmem:[%s136 + $0x160] sm:$0xff]
        %v205 = vld [vmem:[%s136 + $0x168] sm:$0xff]
        %v206 = vld [vmem:[%s136 + $0x170] sm:$0xff]
        %v207 = vld [vmem:[%s136 + $0x178] sm:$0xff]
        %v208 = vld [vmem:[%s136 + $0x180] sm:$0xff]
        %v209 = vld [vmem:[%s136 + $0x188] sm:$0xff]
        %v210 = vld [vmem:[%s136 + $0x190] sm:$0xff]
        %v211 = vld [vmem:[%s136 + $0x198] sm:$0xff]
        %v212 = vld [vmem:[%s136 + $0x1a0] sm:$0xff]
        %v213 = vld [vmem:[%s136 + $0x1a8] sm:$0xff]
        %v214 = vld [vmem:[%s136 + $0x1b0] sm:$0xff]
        %v215 = vld [vmem:[%s136 + $0x1b8] sm:$0xff]
        %v216 = vld [vmem:[%s136 + $0x1c0] sm:$0xff]
        %v217 = vld [vmem:[%s136 + $0x1c8] sm:$0xff]
        %v218 = vld [vmem:[%s136 + $0x1d0] sm:$0xff]
        %v219 = vld [vmem:[%s136 + $0x1d8] sm:$0xff]
        %v220 = vld [vmem:[%s136 + $0x1e0] sm:$0xff]
        %v221 = vld [vmem:[%s136 + $0x1e8] sm:$0xff]
        %v222 = vld [vmem:[%s136 + $0x1f0] sm:$0xff]
        %v223 = vld [vmem:[%s136 + $0x1f8] sm:$0xff]
        %v224 = vld [vmem:[%s136 + $0x200] sm:$0xff]
        %v225 = vld [vmem:[%s136 + $0x208] sm:$0xff]
        %v226 = vld [vmem:[%s136 + $0x210] sm:$0xff]
        %v227 = vld [vmem:[%s136 + $0x218] sm:$0xff]
        %v228 = vld [vmem:[%s136 + $0x220] sm:$0xff]
        %v229 = vld [vmem:[%s136 + $0x228] sm:$0xff]
        %v230 = vld [vmem:[%s136 + $0x230] sm:$0xff]
        %v231 = vld [vmem:[%s136 + $0x238] sm:$0xff]
        %v232 = vld [vmem:[%s136 + $0x240] sm:$0xff]
        %v233 = vld [vmem:[%s136 + $0x248] sm:$0xff]
        %v234 = vld [vmem:[%s136 + $0x250] sm:$0xff]
        %v235 = vld [vmem:[%s136 + $0x258] sm:$0xff]
        %v236 = vld [vmem:[%s136 + $0x260] sm:$0xff]
        %v237 = vld [vmem:[%s136 + $0x268] sm:$0xff]
        %v238 = vld [vmem:[%s136 + $0x270] sm:$0xff]
        %v239 = vld [vmem:[%s136 + $0x278] sm:$0xff]
        %v240 = vld [vmem:[%s136 + $0x280] sm:$0xff]
        %v241 = vld [vmem:[%s136 + $0x288] sm:$0xff]
        %v242 = vld [vmem:[%s136 + $0x290] sm:$0xff]
        %v243 = vld [vmem:[%s136 + $0x298] sm:$0xff]
        %v244 = vld [vmem:[%s136 + $0x2a0] sm:$0xff]
        %v245 = vld [vmem:[%s136 + $0x2a8] sm:$0xff]
        %v246 = vld [vmem:[%s136 + $0x2b0] sm:$0xff]
        %v247 = vld [vmem:[%s136 + $0x2b8] sm:$0xff]
        %v248 = vld [vmem:[%s136 + $0x2c0] sm:$0xff]
        %v249 = vld [vmem:[%s136 + $0x2c8] sm:$0xff]
        %v250 = vld [vmem:[%s136 + $0x2d0] sm:$0xff]
        %v251 = vld [vmem:[%s136 + $0x2d8] sm:$0xff]
        %v252 = vld [vmem:[%s136 + $0x2e0] sm:$0xff]
        %v253 = vld [vmem:[%s136 + $0x2e8] sm:$0xff]
        %v254 = vld [vmem:[%s136 + $0x2f0] sm:$0xff]
        %v255 = vld [vmem:[%s136 + $0x2f8] sm:$0xff]
        %v256 = vld [vmem:[%s136 + $0x300] sm:$0xff]
        %v257 = vld [vmem:[%s136 + $0x308] sm:$0xff]
        %v258 = vld [vmem:[%s136 + $0x310] sm:$0xff]
        %v259 = vld [vmem:[%s136 + $0x318] sm:$0xff]
        %v260 = vld [vmem:[%s136 + $0x320] sm:$0xff]
        %v261 = vld [vmem:[%s136 + $0x328] sm:$0xff]
        %v262 = vld [vmem:[%s136 + $0x330] sm:$0xff]
        %v263 = vld [vmem:[%s136 + $0x338] sm:$0xff]
        %v264 = vld [vmem:[%s136 + $0x340] sm:$0xff]
        %v265 = vld [vmem:[%s136 + $0x348] sm:$0xff]
        %v266 = vld [vmem:[%s136 + $0x350] sm:$0xff]
        %v267 = vld [vmem:[%s136 + $0x358] sm:$0xff]
        %v268 = vld [vmem:[%s136 + $0x360] sm:$0xff]
        %v269 = vld [vmem:[%s136 + $0x368] sm:$0xff]
        %v270 = vld [vmem:[%s136 + $0x370] sm:$0xff]
        %v271 = vld [vmem:[%s136 + $0x378] sm:$0xff]
        %v272 = vld [vmem:[%s136 + $0x380] sm:$0xff]
        %v273 = vld [vmem:[%s136 + $0x388] sm:$0xff]
        %v274 = vld [vmem:[%s136 + $0x390] sm:$0xff]
        %v275 = vld [vmem:[%s136 + $0x398] sm:$0xff]
        %v276 = vld [vmem:[%s136 + $0x3a0] sm:$0xff]
        %v277 = vld [vmem:[%s136 + $0x3a8] sm:$0xff]
        %v278 = vld [vmem:[%s136 + $0x3b0] sm:$0xff]
        %v279 = vld [vmem:[%s136 + $0x3b8] sm:$0xff]
        %v280 = vld [vmem:[%s136 + $0x3c0] sm:$0xff]
        %v281 = vld [vmem:[%s136 + $0x3c8] sm:$0xff]
        %v282 = vld [vmem:[%s136 + $0x3d0] sm:$0xff]
        %v283 = vld [vmem:[%s136 + $0x3d8] sm:$0xff]
        %v284 = vld [vmem:[%s136 + $0x3e0] sm:$0xff]
        %v285 = vld [vmem:[%s136 + $0x3e8] sm:$0xff]
        %v286 = vld [vmem:[%s136 + $0x3f0] sm:$0xff]
        %v287 = vld [vmem:[%s136 + $0x3f8] sm:$0xff]
        %v288 = vld [vmem:[%s136 + $0x400] sm:$0xff]
        %v289 = vld [vmem:[%s136 + $0x408] sm:$0xff]
        %v290 = vld [vmem:[%s136 + $0x410] sm:$0xff]
        %v291 = vld [vmem:[%s136 + $0x418] sm:$0xff]
        %v292 = vld [vmem:[%s136 + $0x420] sm:$0xff]
        %v293 = vld [vmem:[%s136 + $0x428] sm:$0xff]
        %v294 = vld [vmem:[%s136 + $0x430] sm:$0xff]
        %v295 = vld [vmem:[%s136 + $0x438] sm:$0xff]
        %v296 = vld [vmem:[%s136 + $0x440] sm:$0xff]
        %v297 = vld [vmem:[%s136 + $0x448] sm:$0xff]
        %v298 = vld [vmem:[%s136 + $0x450] sm:$0xff]
        %v299 = vld [vmem:[%s136 + $0x458] sm:$0xff]
        %v300 = vld [vmem:[%s136 + $0x460] sm:$0xff]
        %v301 = vld [vmem:[%s136 + $0x468] sm:$0xff]
        %v302 = vld [vmem:[%s136 + $0x470] sm:$0xff]
        %v303 = vld [vmem:[%s136 + $0x478] sm:$0xff]
        %v304 = vld [vmem:[%s136 + $0x480] sm:$0xff]
        %v305 = vld [vmem:[%s136 + $0x488] sm:$0xff]
        %v306 = vld [vmem:[%s136 + $0x490] sm:$0xff]
        %v307 = vld [vmem:[%s136 + $0x498] sm:$0xff]
        %v308 = vld [vmem:[%s136 + $0x4a0] sm:$0xff]
        %v309 = vld [vmem:[%s136 + $0x4a8] sm:$0xff]
        %v310 = vld [vmem:[%s136 + $0x4b0] sm:$0xff]
        %v311 = vld [vmem:[%s136 + $0x4b8] sm:$0xff]
        %v312 = vld [vmem:[%s136 + $0x4c0] sm:$0xff]
        %v313 = vld [vmem:[%s136 + $0x4c8] sm:$0xff]
        %v314 = vld [vmem:[%s136 + $0x4d0] sm:$0xff]
        %v315 = vld [vmem:[%s136 + $0x4d8] sm:$0xff]
        %v316 = vld [vmem:[%s136 + $0x4e0] sm:$0xff]
        %v317 = vld [vmem:[%s136 + $0x4e8] sm:$0xff]
        %v318 = vld [vmem:[%s136 + $0x4f0] sm:$0xff]
        %v319 = vld [vmem:[%s136 + $0x4f8] sm:$0xff]
        %v320 = vld [vmem:[%s136 + $0x500] sm:$0xff]
        %v321 = vld [vmem:[%s136 + $0x508] sm:$0xff]
        %v322 = vld [vmem:[%s136 + $0x510] sm:$0xff]
        %v323 = vld [vmem:[%s136 + $0x518] sm:$0xff]
        %v324 = vld [vmem:[%s136 + $0x520] sm:$0xff]
        %v325 = vld [vmem:[%s136 + $0x528] sm:$0xff]
        %v326 = vld [vmem:[%s136 + $0x530] sm:$0xff]
        %v327 = vld [vmem:[%s136 + $0x538] sm:$0xff]
        %v328 = vld [vmem:[%s136 + $0x540] sm:$0xff]
        %v329 = vld [vmem:[%s136 + $0x548] sm:$0xff]
        %v330 = vld [vmem:[%s136 + $0x550] sm:$0xff]
        %v331 = vld [vmem:[%s136 + $0x558] sm:$0xff]
        %v332 = vld [vmem:[%s136 + $0x560] sm:$0xff]
        %v333 = vld [vmem:[%s136 + $0x568] sm:$0xff]
        %v334 = vld [vmem:[%s136 + $0x570] sm:$0xff]
        %v335 = vld [vmem:[%s136 + $0x578] sm:$0xff]
        %v336 = vld [vmem:[%s136 + $0x580] sm:$0xff]
        %v337 = vld [vmem:[%s136 + $0x588] sm:$0xff]
        %v338 = vld [vmem:[%s136 + $0x590] sm:$0xff]
        %v339 = vld [vmem:[%s136 + $0x598] sm:$0xff]
        %v340 = vld [vmem:[%s136 + $0x5a0] sm:$0xff]
        %v341 = vld [vmem:[%s136 + $0x5a8] sm:$0xff]
        %v342 = vld [vmem:[%s136 + $0x5b0] sm:$0xff]
        %v343 = vld [vmem:[%s136 + $0x5b8] sm:$0xff]
        %v344 = vld [vmem:[%s136 + $0x5c0] sm:$0xff]
        %v345 = vld [vmem:[%s136 + $0x5c8] sm:$0xff]
        %v346 = vld [vmem:[%s136 + $0x5d0] sm:$0xff]
        %v347 = vld [vmem:[%s136 + $0x5d8] sm:$0xff]
        %v348 = vld [vmem:[%s136 + $0x5e0] sm:$0xff]
        %v349 = vld [vmem:[%s136 + $0x5e8] sm:$0xff]
        %v350 = vld [vmem:[%s136 + $0x5f0] sm:$0xff]
        %v351 = vld [vmem:[%s136 + $0x5f8] sm:$0xff]
        %v352 = vld [vmem:[%s136 + $0x600] sm:$0xff]
        %v353 = vld [vmem:[%s136 + $0x608] sm:$0xff]
        %v354 = vld [vmem:[%s136 + $0x610] sm:$0xff]
        %v355 = vld [vmem:[%s136 + $0x618] sm:$0xff]
        %v356 = vld [vmem:[%s136 + $0x620] sm:$0xff]
        %v357 = vld [vmem:[%s136 + $0x628] sm:$0xff]
        %v358 = vld [vmem:[%s136 + $0x630] sm:$0xff]
        %v359 = vld [vmem:[%s136 + $0x638] sm:$0xff]
        %v360 = vld [vmem:[%s136 + $0x640] sm:$0xff]
        %v361 = vld [vmem:[%s136 + $0x648] sm:$0xff]
        %v362 = vld [vmem:[%s136 + $0x650] sm:$0xff]
        %v363 = vld [vmem:[%s136 + $0x658] sm:$0xff]
        %v364 = vld [vmem:[%s136 + $0x660] sm:$0xff]
        %v365 = vld [vmem:[%s136 + $0x668] sm:$0xff]
        %v366 = vld [vmem:[%s136 + $0x670] sm:$0xff]
        %v367 = vld [vmem:[%s136 + $0x678] sm:$0xff]
        %v368 = vld [vmem:[%s136 + $0x680] sm:$0xff]
        %v369 = vld [vmem:[%s136 + $0x688] sm:$0xff]
        %v370 = vld [vmem:[%s136 + $0x690] sm:$0xff]
        %v371 = vld [vmem:[%s136 + $0x698] sm:$0xff]
        %v372 = vld [vmem:[%s136 + $0x6a0] sm:$0xff]
        %v373 = vld [vmem:[%s136 + $0x6a8] sm:$0xff]
        %v374 = vld [vmem:[%s136 + $0x6b0] sm:$0xff]
        %v375 = vld [vmem:[%s136 + $0x6b8] sm:$0xff]
        %v376 = vld [vmem:[%s136 + $0x6c0] sm:$0xff]
        %v377 = vld [vmem:[%s136 + $0x6c8] sm:$0xff]
        %v378 = vld [vmem:[%s136 + $0x6d0] sm:$0xff]
        %v379 = vld [vmem:[%s136 + $0x6d8] sm:$0xff]
        %v380 = vld [vmem:[%s136 + $0x6e0] sm:$0xff]
        %v381 = vld [vmem:[%s136 + $0x6e8] sm:$0xff]
        %v382 = vld [vmem:[%s136 + $0x6f0] sm:$0xff]
        %v383 = vld [vmem:[%s136 + $0x6f8] sm:$0xff]
        %v384 = vld [vmem:[%s136 + $0x700] sm:$0xff]
        %v385 = vld [vmem:[%s136 + $0x708] sm:$0xff]
        %v386 = vld [vmem:[%s136 + $0x710] sm:$0xff]
        %v387 = vld [vmem:[%s136 + $0x718] sm:$0xff]
        %v388 = vld [vmem:[%s136 + $0x720] sm:$0xff]
        %v389 = vld [vmem:[%s136 + $0x728] sm:$0xff]
        %v390 = vld [vmem:[%s136 + $0x730] sm:$0xff]
        %v391 = vld [vmem:[%s136 + $0x738] sm:$0xff]
        %v392 = vld [vmem:[%s136 + $0x740] sm:$0xff]
        %v393 = vld [vmem:[%s136 + $0x748] sm:$0xff]
        %v394 = vld [vmem:[%s136 + $0x750] sm:$0xff]
        %v395 = vld [vmem:[%s136 + $0x758] sm:$0xff]
        %v396 = vld [vmem:[%s136 + $0x760] sm:$0xff]
        %v397 = vld [vmem:[%s136 + $0x768] sm:$0xff]
        %v398 = vld [vmem:[%s136 + $0x770] sm:$0xff]
        %v399 = vld [vmem:[%s136 + $0x778] sm:$0xff]
        %v400 = vld [vmem:[%s136 + $0x780] sm:$0xff]
        %v401 = vld [vmem:[%s136 + $0x788] sm:$0xff]
        %v402 = vld [vmem:[%s136 + $0x790] sm:$0xff]
        %v403 = vld [vmem:[%s136 + $0x798] sm:$0xff]
        %v404 = vld [vmem:[%s136 + $0x7a0] sm:$0xff]
        %v405 = vld [vmem:[%s136 + $0x7a8] sm:$0xff]
        %v406 = vld [vmem:[%s136 + $0x7b0] sm:$0xff]
        %v407 = vld [vmem:[%s136 + $0x7b8] sm:$0xff]
        %v408 = vld [vmem:[%s136 + $0x7c0] sm:$0xff]
        %v409 = vld [vmem:[%s136 + $0x7c8] sm:$0xff]
        %v410 = vld [vmem:[%s136 + $0x7d0] sm:$0xff]
        %v411 = vld [vmem:[%s136 + $0x7d8] sm:$0xff]
        %v412 = vld [vmem:[%s136 + $0x7e0] sm:$0xff]
        %v413 = vld [vmem:[%s136 + $0x7e8] sm:$0xff]
        %v414 = vld [vmem:[%s136 + $0x7f0] sm:$0xff]
        %v415 = vld [vmem:[%s136 + $0x7f8] sm:$0xff]
        %416 = vst [vmem:[%s155] sm:$0xff] %v160
        %417 = vst [vmem:[%s155 + $0x8] sm:$0xff] %v161
        %418 = vst [vmem:[%s155 + $0x10] sm:$0xff] %v162
        %419 = vst [vmem:[%s155 + $0x18] sm:$0xff] %v163
        %420 = vst [vmem:[%s155 + $0x20] sm:$0xff] %v164
        %421 = vst [vmem:[%s155 + $0x28] sm:$0xff] %v165
        %422 = vst [vmem:[%s155 + $0x30] sm:$0xff] %v166
        %423 = vst [vmem:[%s155 + $0x38] sm:$0xff] %v167
        %424 = vst [vmem:[%s155 + $0x40] sm:$0xff] %v168
        %425 = vst [vmem:[%s155 + $0x48] sm:$0xff] %v169
        %426 = vst [vmem:[%s155 + $0x50] sm:$0xff] %v170
        %427 = vst [vmem:[%s155 + $0x58] sm:$0xff] %v171
        %428 = vst [vmem:[%s155 + $0x60] sm:$0xff] %v172
        %429 = vst [vmem:[%s155 + $0x68] sm:$0xff] %v173
        %430 = vst [vmem:[%s155 + $0x70] sm:$0xff] %v174
        %431 = vst [vmem:[%s155 + $0x78] sm:$0xff] %v175
        %432 = vst [vmem:[%s155 + $0x80] sm:$0xff] %v176
        %433 = vst [vmem:[%s155 + $0x88] sm:$0xff] %v177
        %434 = vst [vmem:[%s155 + $0x90] sm:$0xff] %v178
        %435 = vst [vmem:[%s155 + $0x98] sm:$0xff] %v179
        %436 = vst [vmem:[%s155 + $0xa0] sm:$0xff] %v180
        %437 = vst [vmem:[%s155 + $0xa8] sm:$0xff] %v181
        %438 = vst [vmem:[%s155 + $0xb0] sm:$0xff] %v182
        %439 = vst [vmem:[%s155 + $0xb8] sm:$0xff] %v183
        %440 = vst [vmem:[%s155 + $0xc0] sm:$0xff] %v184
        %441 = vst [vmem:[%s155 + $0xc8] sm:$0xff] %v185
        %442 = vst [vmem:[%s155 + $0xd0] sm:$0xff] %v186
        %443 = vst [vmem:[%s155 + $0xd8] sm:$0xff] %v187
        %444 = vst [vmem:[%s155 + $0xe0] sm:$0xff] %v188
        %445 = vst [vmem:[%s155 + $0xe8] sm:$0xff] %v189
        %446 = vst [vmem:[%s155 + $0xf0] sm:$0xff] %v190
        %447 = vst [vmem:[%s155 + $0xf8] sm:$0xff] %v191
        %448 = vst [vmem:[%s155 + $0x100] sm:$0xff] %v192
        %449 = vst [vmem:[%s155 + $0x108] sm:$0xff] %v193
        %450 = vst [vmem:[%s155 + $0x110] sm:$0xff] %v194
        %451 = vst [vmem:[%s155 + $0x118] sm:$0xff] %v195
        %452 = vst [vmem:[%s155 + $0x120] sm:$0xff] %v196
        %453 = vst [vmem:[%s155 + $0x128] sm:$0xff] %v197
        %454 = vst [vmem:[%s155 + $0x130] sm:$0xff] %v198
        %455 = vst [vmem:[%s155 + $0x138] sm:$0xff] %v199
        %456 = vst [vmem:[%s155 + $0x140] sm:$0xff] %v200
        %457 = vst [vmem:[%s155 + $0x148] sm:$0xff] %v201
        %458 = vst [vmem:[%s155 + $0x150] sm:$0xff] %v202
        %459 = vst [vmem:[%s155 + $0x158] sm:$0xff] %v203
        %460 = vst [vmem:[%s155 + $0x160] sm:$0xff] %v204
        %461 = vst [vmem:[%s155 + $0x168] sm:$0xff] %v205
        %462 = vst [vmem:[%s155 + $0x170] sm:$0xff] %v206
        %463 = vst [vmem:[%s155 + $0x178] sm:$0xff] %v207
        %464 = vst [vmem:[%s155 + $0x180] sm:$0xff] %v208
        %465 = vst [vmem:[%s155 + $0x188] sm:$0xff] %v209
        %466 = vst [vmem:[%s155 + $0x190] sm:$0xff] %v210
        %467 = vst [vmem:[%s155 + $0x198] sm:$0xff] %v211
        %468 = vst [vmem:[%s155 + $0x1a0] sm:$0xff] %v212
        %469 = vst [vmem:[%s155 + $0x1a8] sm:$0xff] %v213
        %470 = vst [vmem:[%s155 + $0x1b0] sm:$0xff] %v214
        %471 = vst [vmem:[%s155 + $0x1b8] sm:$0xff] %v215
        %472 = vst [vmem:[%s155 + $0x1c0] sm:$0xff] %v216
        %473 = vst [vmem:[%s155 + $0x1c8] sm:$0xff] %v217
        %474 = vst [vmem:[%s155 + $0x1d0] sm:$0xff] %v218
        %475 = vst [vmem:[%s155 + $0x1d8] sm:$0xff] %v219
        %476 = vst [vmem:[%s155 + $0x1e0] sm:$0xff] %v220
        %477 = vst [vmem:[%s155 + $0x1e8] sm:$0xff] %v221
        %478 = vst [vmem:[%s155 + $0x1f0] sm:$0xff] %v222
        %479 = vst [vmem:[%s155 + $0x1f8] sm:$0xff] %v223
        %480 = vst [vmem:[%s155 + $0x200] sm:$0xff] %v224
        %481 = vst [vmem:[%s155 + $0x208] sm:$0xff] %v225
        %482 = vst [vmem:[%s155 + $0x210] sm:$0xff] %v226
        %483 = vst [vmem:[%s155 + $0x218] sm:$0xff] %v227
        %484 = vst [vmem:[%s155 + $0x220] sm:$0xff] %v228
        %485 = vst [vmem:[%s155 + $0x228] sm:$0xff] %v229
        %486 = vst [vmem:[%s155 + $0x230] sm:$0xff] %v230
        %487 = vst [vmem:[%s155 + $0x238] sm:$0xff] %v231
        %488 = vst [vmem:[%s155 + $0x240] sm:$0xff] %v232
        %489 = vst [vmem:[%s155 + $0x248] sm:$0xff] %v233
        %490 = vst [vmem:[%s155 + $0x250] sm:$0xff] %v234
        %491 = vst [vmem:[%s155 + $0x258] sm:$0xff] %v235
        %492 = vst [vmem:[%s155 + $0x260] sm:$0xff] %v236
        %493 = vst [vmem:[%s155 + $0x268] sm:$0xff] %v237
        %494 = vst [vmem:[%s155 + $0x270] sm:$0xff] %v238
        %495 = vst [vmem:[%s155 + $0x278] sm:$0xff] %v239
        %496 = vst [vmem:[%s155 + $0x280] sm:$0xff] %v240
        %497 = vst [vmem:[%s155 + $0x288] sm:$0xff] %v241
        %498 = vst [vmem:[%s155 + $0x290] sm:$0xff] %v242
        %499 = vst [vmem:[%s155 + $0x298] sm:$0xff] %v243
        %500 = vst [vmem:[%s155 + $0x2a0] sm:$0xff] %v244
        %501 = vst [vmem:[%s155 + $0x2a8] sm:$0xff] %v245
        %502 = vst [vmem:[%s155 + $0x2b0] sm:$0xff] %v246
        %503 = vst [vmem:[%s155 + $0x2b8] sm:$0xff] %v247
        %504 = vst [vmem:[%s155 + $0x2c0] sm:$0xff] %v248
        %505 = vst [vmem:[%s155 + $0x2c8] sm:$0xff] %v249
        %506 = vst [vmem:[%s155 + $0x2d0] sm:$0xff] %v250
        %507 = vst [vmem:[%s155 + $0x2d8] sm:$0xff] %v251
        %508 = vst [vmem:[%s155 + $0x2e0] sm:$0xff] %v252
        %509 = vst [vmem:[%s155 + $0x2e8] sm:$0xff] %v253
        %510 = vst [vmem:[%s155 + $0x2f0] sm:$0xff] %v254
        %511 = vst [vmem:[%s155 + $0x2f8] sm:$0xff] %v255
        %512 = vst [vmem:[%s155 + $0x300] sm:$0xff] %v256
        %513 = vst [vmem:[%s155 + $0x308] sm:$0xff] %v257
        %514 = vst [vmem:[%s155 + $0x310] sm:$0xff] %v258
        %515 = vst [vmem:[%s155 + $0x318] sm:$0xff] %v259
        %516 = vst [vmem:[%s155 + $0x320] sm:$0xff] %v260
        %517 = vst [vmem:[%s155 + $0x328] sm:$0xff] %v261
        %518 = vst [vmem:[%s155 + $0x330] sm:$0xff] %v262
        %519 = vst [vmem:[%s155 + $0x338] sm:$0xff] %v263
        %520 = vst [vmem:[%s155 + $0x340] sm:$0xff] %v264
        %521 = vst [vmem:[%s155 + $0x348] sm:$0xff] %v265
        %522 = vst [vmem:[%s155 + $0x350] sm:$0xff] %v266
        %523 = vst [vmem:[%s155 + $0x358] sm:$0xff] %v267
        %524 = vst [vmem:[%s155 + $0x360] sm:$0xff] %v268
        %525 = vst [vmem:[%s155 + $0x368] sm:$0xff] %v269
        %526 = vst [vmem:[%s155 + $0x370] sm:$0xff] %v270
        %527 = vst [vmem:[%s155 + $0x378] sm:$0xff] %v271
        %528 = vst [vmem:[%s155 + $0x380] sm:$0xff] %v272
        %529 = vst [vmem:[%s155 + $0x388] sm:$0xff] %v273
        %530 = vst [vmem:[%s155 + $0x390] sm:$0xff] %v274
        %531 = vst [vmem:[%s155 + $0x398] sm:$0xff] %v275
        %532 = vst [vmem:[%s155 + $0x3a0] sm:$0xff] %v276
        %533 = vst [vmem:[%s155 + $0x3a8] sm:$0xff] %v277
        %534 = vst [vmem:[%s155 + $0x3b0] sm:$0xff] %v278
        %535 = vst [vmem:[%s155 + $0x3b8] sm:$0xff] %v279
        %536 = vst [vmem:[%s155 + $0x3c0] sm:$0xff] %v280
        %537 = vst [vmem:[%s155 + $0x3c8] sm:$0xff] %v281
        %538 = vst [vmem:[%s155 + $0x3d0] sm:$0xff] %v282
        %539 = vst [vmem:[%s155 + $0x3d8] sm:$0xff] %v283
        %540 = vst [vmem:[%s155 + $0x3e0] sm:$0xff] %v284
        %541 = vst [vmem:[%s155 + $0x3e8] sm:$0xff] %v285
        %542 = vst [vmem:[%s155 + $0x3f0] sm:$0xff] %v286
        %543 = vst [vmem:[%s155 + $0x3f8] sm:$0xff] %v287
        %544 = vst [vmem:[%s155 + $0x400] sm:$0xff] %v288
        %545 = vst [vmem:[%s155 + $0x408] sm:$0xff] %v289
        %546 = vst [vmem:[%s155 + $0x410] sm:$0xff] %v290
        %547 = vst [vmem:[%s155 + $0x418] sm:$0xff] %v291
        %548 = vst [vmem:[%s155 + $0x420] sm:$0xff] %v292
        %549 = vst [vmem:[%s155 + $0x428] sm:$0xff] %v293
        %550 = vst [vmem:[%s155 + $0x430] sm:$0xff] %v294
        %551 = vst [vmem:[%s155 + $0x438] sm:$0xff] %v295
        %552 = vst [vmem:[%s155 + $0x440] sm:$0xff] %v296
        %553 = vst [vmem:[%s155 + $0x448] sm:$0xff] %v297
        %554 = vst [vmem:[%s155 + $0x450] sm:$0xff] %v298
        %555 = vst [vmem:[%s155 + $0x458] sm:$0xff] %v299
        %556 = vst [vmem:[%s155 + $0x460] sm:$0xff] %v300
        %557 = vst [vmem:[%s155 + $0x468] sm:$0xff] %v301
        %558 = vst [vmem:[%s155 + $0x470] sm:$0xff] %v302
        %559 = vst [vmem:[%s155 + $0x478] sm:$0xff] %v303
        %560 = vst [vmem:[%s155 + $0x480] sm:$0xff] %v304
        %561 = vst [vmem:[%s155 + $0x488] sm:$0xff] %v305
        %562 = vst [vmem:[%s155 + $0x490] sm:$0xff] %v306
        %563 = vst [vmem:[%s155 + $0x498] sm:$0xff] %v307
        %564 = vst [vmem:[%s155 + $0x4a0] sm:$0xff] %v308
        %565 = vst [vmem:[%s155 + $0x4a8] sm:$0xff] %v309
        %566 = vst [vmem:[%s155 + $0x4b0] sm:$0xff] %v310
        %567 = vst [vmem:[%s155 + $0x4b8] sm:$0xff] %v311
        %568 = vst [vmem:[%s155 + $0x4c0] sm:$0xff] %v312
        %569 = vst [vmem:[%s155 + $0x4c8] sm:$0xff] %v313
        %570 = vst [vmem:[%s155 + $0x4d0] sm:$0xff] %v314
        %571 = vst [vmem:[%s155 + $0x4d8] sm:$0xff] %v315
        %572 = vst [vmem:[%s155 + $0x4e0] sm:$0xff] %v316
        %573 = vst [vmem:[%s155 + $0x4e8] sm:$0xff] %v317
        %574 = vst [vmem:[%s155 + $0x4f0] sm:$0xff] %v318
        %575 = vst [vmem:[%s155 + $0x4f8] sm:$0xff] %v319
        %576 = vst [vmem:[%s155 + $0x500] sm:$0xff] %v320
        %577 = vst [vmem:[%s155 + $0x508] sm:$0xff] %v321
        %578 = vst [vmem:[%s155 + $0x510] sm:$0xff] %v322
        %579 = vst [vmem:[%s155 + $0x518] sm:$0xff] %v323
        %580 = vst [vmem:[%s155 + $0x520] sm:$0xff] %v324
        %581 = vst [vmem:[%s155 + $0x528] sm:$0xff] %v325
        %582 = vst [vmem:[%s155 + $0x530] sm:$0xff] %v326
        %583 = vst [vmem:[%s155 + $0x538] sm:$0xff] %v327
        %584 = vst [vmem:[%s155 + $0x540] sm:$0xff] %v328
        %585 = vst [vmem:[%s155 + $0x548] sm:$0xff] %v329
        %586 = vst [vmem:[%s155 + $0x550] sm:$0xff] %v330
        %587 = vst [vmem:[%s155 + $0x558] sm:$0xff] %v331
        %588 = vst [vmem:[%s155 + $0x560] sm:$0xff] %v332
        %589 = vst [vmem:[%s155 + $0x568] sm:$0xff] %v333
        %590 = vst [vmem:[%s155 + $0x570] sm:$0xff] %v334
        %591 = vst [vmem:[%s155 + $0x578] sm:$0xff] %v335
        %592 = vst [vmem:[%s155 + $0x580] sm:$0xff] %v336
        %593 = vst [vmem:[%s155 + $0x588] sm:$0xff] %v337
        %594 = vst [vmem:[%s155 + $0x590] sm:$0xff] %v338
        %595 = vst [vmem:[%s155 + $0x598] sm:$0xff] %v339
        %596 = vst [vmem:[%s155 + $0x5a0] sm:$0xff] %v340
        %597 = vst [vmem:[%s155 + $0x5a8] sm:$0xff] %v341
        %598 = vst [vmem:[%s155 + $0x5b0] sm:$0xff] %v342
        %599 = vst [vmem:[%s155 + $0x5b8] sm:$0xff] %v343
        %600 = vst [vmem:[%s155 + $0x5c0] sm:$0xff] %v344
        %601 = vst [vmem:[%s155 + $0x5c8] sm:$0xff] %v345
        %602 = vst [vmem:[%s155 + $0x5d0] sm:$0xff] %v346
        %603 = vst [vmem:[%s155 + $0x5d8] sm:$0xff] %v347
        %604 = vst [vmem:[%s155 + $0x5e0] sm:$0xff] %v348
        %605 = vst [vmem:[%s155 + $0x5e8] sm:$0xff] %v349
        %606 = vst [vmem:[%s155 + $0x5f0] sm:$0xff] %v350
        %607 = vst [vmem:[%s155 + $0x5f8] sm:$0xff] %v351
        %608 = vst [vmem:[%s155 + $0x600] sm:$0xff] %v352
        %609 = vst [vmem:[%s155 + $0x608] sm:$0xff] %v353
        %610 = vst [vmem:[%s155 + $0x610] sm:$0xff] %v354
        %611 = vst [vmem:[%s155 + $0x618] sm:$0xff] %v355
        %612 = vst [vmem:[%s155 + $0x620] sm:$0xff] %v356
        %613 = vst [vmem:[%s155 + $0x628] sm:$0xff] %v357
        %614 = vst [vmem:[%s155 + $0x630] sm:$0xff] %v358
        %615 = vst [vmem:[%s155 + $0x638] sm:$0xff] %v359
        %616 = vst [vmem:[%s155 + $0x640] sm:$0xff] %v360
        %617 = vst [vmem:[%s155 + $0x648] sm:$0xff] %v361
        %618 = vst [vmem:[%s155 + $0x650] sm:$0xff] %v362
        %619 = vst [vmem:[%s155 + $0x658] sm:$0xff] %v363
        %620 = vst [vmem:[%s155 + $0x660] sm:$0xff] %v364
        %621 = vst [vmem:[%s155 + $0x668] sm:$0xff] %v365
        %622 = vst [vmem:[%s155 + $0x670] sm:$0xff] %v366
        %623 = vst [vmem:[%s155 + $0x678] sm:$0xff] %v367
        %624 = vst [vmem:[%s155 + $0x680] sm:$0xff] %v368
        %625 = vst [vmem:[%s155 + $0x688] sm:$0xff] %v369
        %626 = vst [vmem:[%s155 + $0x690] sm:$0xff] %v370
        %627 = vst [vmem:[%s155 + $0x698] sm:$0xff] %v371
        %628 = vst [vmem:[%s155 + $0x6a0] sm:$0xff] %v372
        %629 = vst [vmem:[%s155 + $0x6a8] sm:$0xff] %v373
        %630 = vst [vmem:[%s155 + $0x6b0] sm:$0xff] %v374
        %631 = vst [vmem:[%s155 + $0x6b8] sm:$0xff] %v375
        %632 = vst [vmem:[%s155 + $0x6c0] sm:$0xff] %v376
        %633 = vst [vmem:[%s155 + $0x6c8] sm:$0xff] %v377
        %634 = vst [vmem:[%s155 + $0x6d0] sm:$0xff] %v378
        %635 = vst [vmem:[%s155 + $0x6d8] sm:$0xff] %v379
        %636 = vst [vmem:[%s155 + $0x6e0] sm:$0xff] %v380
        %637 = vst [vmem:[%s155 + $0x6e8] sm:$0xff] %v381
        %638 = vst [vmem:[%s155 + $0x6f0] sm:$0xff] %v382
        %639 = vst [vmem:[%s155 + $0x6f8] sm:$0xff] %v383
        %640 = vst [vmem:[%s155 + $0x700] sm:$0xff] %v384
        %641 = vst [vmem:[%s155 + $0x708] sm:$0xff] %v385
        %642 = vst [vmem:[%s155 + $0x710] sm:$0xff] %v386
        %643 = vst [vmem:[%s155 + $0x718] sm:$0xff] %v387
        %644 = vst [vmem:[%s155 + $0x720] sm:$0xff] %v388
        %645 = vst [vmem:[%s155 + $0x728] sm:$0xff] %v389
        %646 = vst [vmem:[%s155 + $0x730] sm:$0xff] %v390
        %647 = vst [vmem:[%s155 + $0x738] sm:$0xff] %v391
        %648 = vst [vmem:[%s155 + $0x740] sm:$0xff] %v392
        %649 = vst [vmem:[%s155 + $0x748] sm:$0xff] %v393
        %650 = vst [vmem:[%s155 + $0x750] sm:$0xff] %v394
        %651 = vst [vmem:[%s155 + $0x758] sm:$0xff] %v395
        %652 = vst [vmem:[%s155 + $0x760] sm:$0xff] %v396
        %653 = vst [vmem:[%s155 + $0x768] sm:$0xff] %v397
        %654 = vst [vmem:[%s155 + $0x770] sm:$0xff] %v398
        %655 = vst [vmem:[%s155 + $0x778] sm:$0xff] %v399
        %656 = vst [vmem:[%s155 + $0x780] sm:$0xff] %v400
        %657 = vst [vmem:[%s155 + $0x788] sm:$0xff] %v401
        %658 = vst [vmem:[%s155 + $0x790] sm:$0xff] %v402
        %659 = vst [vmem:[%s155 + $0x798] sm:$0xff] %v403
        %660 = vst [vmem:[%s155 + $0x7a0] sm:$0xff] %v404
        %661 = vst [vmem:[%s155 + $0x7a8] sm:$0xff] %v405
        %662 = vst [vmem:[%s155 + $0x7b0] sm:$0xff] %v406
        %663 = vst [vmem:[%s155 + $0x7b8] sm:$0xff] %v407
        %664 = vst [vmem:[%s155 + $0x7c0] sm:$0xff] %v408
        %665 = vst [vmem:[%s155 + $0x7c8] sm:$0xff] %v409
        %666 = vst [vmem:[%s155 + $0x7d0] sm:$0xff] %v410
        %667 = vst [vmem:[%s155 + $0x7d8] sm:$0xff] %v411
        %668 = vst [vmem:[%s155 + $0x7e0] sm:$0xff] %v412
        %669 = vst [vmem:[%s155 + $0x7e8] sm:$0xff] %v413
        %670 = vst [vmem:[%s155 + $0x7f0] sm:$0xff] %v414
        %671 = vst [vmem:[%s155 + $0x7f8] sm:$0xff] %v415
        %s672 = sand.u32 %s68, 1
        %s673 = scalar_lea.sflag [#allocation4], %s672
        %s674 = sand.u32 %s68, 1
        %s675 = smul.addr %s674, 2048
        %s676 = scalar_lea.vmem [#allocation5], %s675
        // Predicated region
        $region29: #{tpu_custom_call.1} parent=23 // pred_check
          %p677 = pneg %p78
        $region30: #{tpu_custom_call.1} parent=23 // pred_check_branch
          %679 = sbr.rel (%p677) target = $region32
        $region31: #{tpu_custom_call.1} parent=23 // pred_region
          %s680 = smul.u32 64, %s22
          %s681 = smul.u32 4, %s23
          %683 = vsyncadd %s673, 0
          %s684 = smul.addr %s680, 16
          %s685 = sadd.s32 %s681, %s684
          %s686 = smul.addr %s685, 8
          %s687 = scalar_lea.hbm %s1, %s686
          %s688 = sshll.u32 %s676, 4
          %s689 = int_to_ptr.vmem [resolvable:$true] %s688
          %s690 = sshll.u32 %s687, 4
          %s691 = int_to_ptr.hbm [resolvable:$true] %s690
          %696 = dma.vmem_to_hbm [thread:$0]  %s689, 32768, %s691, %s673, 512, 2048, 32
        $region32: #{tpu_custom_call.1} parent=23 // pred_fallthru
          _
      $region24: #{tpu_custom_call.1} parent=5 // pred_fallthru
        _
      %p697 = scmp.le.s32.totalorder 2, %s13
      // Predicated region
      $region33: #{tpu_custom_call.1} parent=5 // pred_check
        %p698 = pneg %p697
      $region34: #{tpu_custom_call.1} parent=5 // pred_check_branch
        %700 = sbr.rel (%p698) target = $region36
      $region35: #{tpu_custom_call.1} parent=5 // pred_region
        %s701 = ssub.s32 %s13, 2
        // Predicated region
        $region37: #{tpu_custom_call.1} parent=35 // pred_check
          %p702 = pneg %p84
        $region38: #{tpu_custom_call.1} parent=35 // pred_check_branch
          %704 = sbr.rel (%p702) target = $region40
        $region39: #{tpu_custom_call.1} parent=35 // pred_region
          %s705 = sand.u32 %s69, 1
          %s706 = scalar_lea.sflag [#allocation4], %s705
          %s707 = sand.u32 %s69, 1
          %s708 = smul.addr %s707, 2048
          %s709 = scalar_lea.vmem [#allocation5], %s708
          %711 = dma.done %s706, 32768
        $region40: #{tpu_custom_call.1} parent=35 // pred_fallthru
          _
      $region36: #{tpu_custom_call.1} parent=5 // pred_fallthru
        _
    $region6: #{tpu_custom_call.1} parent=1 // loop_footer
      %s17 = sadd.s32 1, %s13
    $region7: #{tpu_custom_call.1} parent=1 // loop_footer_branch
      %12 = sbr.rel target = $region3
    $region8: #{tpu_custom_call.1} parent=1 // loop_exit
      _
    %712 = vsyncpa [#allocation3], 1
    %s713 = scalar_lea.sflag [#allocation3], 1
    %714 = vsyncpa %s713, 1
    %715 = vsyncpa [#allocation4], 1
    %s716 = scalar_lea.sflag [#allocation4], 1
    %717 = vsyncpa %s716, 1

</llo_original>
